<compile_context>
chip_gen: v6e
topology: v6e:2x2x1
jax: 0.10.0
libtpu: 0.0.40
codegen_flags: <defaults>
</compile_context>

<pallas_src>
import functools
import math

import jax
import jax.numpy as jnp
from jax import lax
from jax.experimental import pallas as pl
from jax.experimental.pallas import tpu as pltpu


LANE = 128


def _round_up(x, m):
    return ((x + m - 1) // m) * m


def _vmem_capacity_bytes():
    """Physical per-core VMEM; conservative 64 MiB fallback (v7x)."""
    try:
        cap = int(pltpu.get_tpu_info().vmem_capacity_bytes)
        if cap > 0:
            return cap
    except Exception:
        pass
    return 64 * 2**20


def _intra_node_agg_kernel(
    x_ref,      # (Bt, Np, Dpi)   input block (compute dtype)
    wp_ref,     # (Dpi, Dpo)      proj weight (transposed, padded)
    bp_ref,     # (1, Dpo)        f32
    w1_ref,     # (Dpo, Dpo)      FFN input layer
    b1_ref,     # (1, Dpo)
    w2_ref,     # (Dpo, Dpo)      FFN output layer
    b2_ref,     # (1, Dpo)
    wqkv_ref,   # (Dpo, 3*Dpo)    fused QKV weight (bias-free)
    o_ref,      # (Bt, Np, Dpo)   output block (compute dtype)
    *,
    scale,          # 1/sqrt(true Dout)
    dpad,           # padded feature width (multiple of 128)
    n_true,         # true token count (<= Np)
    approx_recip,   # use EUP approx reciprocal for softmax denom
):
    bt, n_pad, dpi = x_ref.shape
    cdt = wp_ref.dtype  # compute dtype (f32 or bf16)
    rows = bt * n_pad

    # Flatten batch*tokens so the dense layers feed the MXU a tall LHS.
    # n_pad is a multiple of the sublane count -> layout-preserving reshape.
    x2d = x_ref[...].reshape(rows, dpi)

    # ---- projection (input_dim -> output_dim), f32 accumulation ----
    h = jnp.dot(x2d, wp_ref[...], preferred_element_type=jnp.float32) + bp_ref[...]

    # ---- FeedForwardNetwork(Dout, Dout, Dout, num_layers=2) ----
    h = jnp.maximum(
        jnp.dot(h.astype(cdt), w1_ref[...], preferred_element_type=jnp.float32)
        + b1_ref[...],
        0.0,
    )
    h = (
        jnp.dot(h.astype(cdt), w2_ref[...], preferred_element_type=jnp.float32)
        + b2_ref[...]
    )

    # ---- fused QKV matmul (bias-free), split at lane multiples of 128 ----
    qkv = jnp.dot(h.astype(cdt), wqkv_ref[...], preferred_element_type=jnp.float32)
    q = qkv[:, 0 * dpad : 1 * dpad].reshape(bt, n_pad, dpad).astype(cdt)
    k = qkv[:, 1 * dpad : 2 * dpad].reshape(bt, n_pad, dpad).astype(cdt)
    v = qkv[:, 2 * dpad : 3 * dpad].reshape(bt, n_pad, dpad).astype(cdt)

    # ---- scaled dot product attention (no mask, no dropout in reference) ----
    # s[b, i, j] = sum_d q[b, i, d] * k[b, j, d]  -- transpose-free contraction.
    s = lax.dot_general(
        q, k,
        dimension_numbers=(((2,), (2,)), ((0,), (0,))),
        preferred_element_type=jnp.float32,
    ) * scale                                              # (Bt, Np, Np)

    # Mask out padded key positions (tokens beyond the true N).
    if n_pad != n_true:
        col = lax.broadcasted_iota(jnp.int32, s.shape, 2)
        s = jnp.where(col < n_true, s, jnp.float32(-1e30))

    s_max = jnp.max(s, axis=-1, keepdims=True)
    p = jnp.exp(s - s_max)
    denom = jnp.sum(p, axis=-1, keepdims=True)
    p = p * pl.reciprocal(denom, approx=approx_recip)

    # out[b, i, d] = sum_j p[b, i, j] * v[b, j, d]
    out = lax.dot_general(
        p.astype(cdt), v,
        dimension_numbers=(((2,), (1,)), ((0,), (0,))),
        preferred_element_type=jnp.float32,
    )                                                      # (Bt, Np, Dpo)

    # NOTE: for large N, replace the materialized (Np, Np) scores with a
    # flash-style online-softmax loop over KV tiles; for very small N, a flat
    # lane-dense (rows, rows) score matmul with a block-diagonal mask removes
    # the per-batch MXU push/pop sequences.
    o_ref[...] = out.astype(o_ref.dtype)


def _pad2d(w, rows, cols):
    return jnp.pad(w, ((0, rows - w.shape[0]), (0, cols - w.shape[1])))


def prepare_params(params, compute_dtype=jnp.float32):
    """One-time weight prep: pad feature dims to lane multiples, fuse QKV,
    cast MXU operands.  Biases stay f32 (added to f32 accumulators)."""
    Din, Dout = params["wp"].shape
    dpi = _round_up(Din, LANE)
    dpo = _round_up(Dout, LANE)
    cdt = jnp.dtype(compute_dtype)

    wp = _pad2d(params["wp"], dpi, dpo).astype(cdt)
    w1 = _pad2d(params["w1"], dpo, dpo).astype(cdt)
    w2 = _pad2d(params["w2"], dpo, dpo).astype(cdt)
    wqkv = jnp.concatenate(
        [_pad2d(params["wq"], dpo, dpo),
         _pad2d(params["wk"], dpo, dpo),
         _pad2d(params["wv"], dpo, dpo)], axis=1,
    ).astype(cdt)                                          # (Dpo, 3*Dpo)
    bp = jnp.pad(params["bp"], ((0, 0), (0, dpo - Dout))).astype(jnp.float32)
    b1 = jnp.pad(params["b1"], ((0, 0), (0, dpo - Dout))).astype(jnp.float32)
    b2 = jnp.pad(params["b2"], ((0, 0), (0, dpo - Dout))).astype(jnp.float32)

    return {
        "wp": wp, "bp": bp, "w1": w1, "b1": b1, "w2": w2, "b2": b2,
        "wqkv": wqkv,
        "din": Din, "dout": Dout, "dpi": dpi, "dpo": dpo,
        "compute_dtype": cdt,
    }


def _pick_batch_tile(B, n_pad, target_rows):
    """Batch tile such that bt*n_pad ~ target_rows and the grid has >= 2 steps
    (so dimension_semantics=('parallel',) can use both v7x TensorCores)."""
    bt = max(1, target_rows // n_pad)
    if B >= 2:
        bt = min(bt, B // 2)
    return max(1, bt)


def intra_node_aggregator_sdpa(x, prepared, *, batch_tile=None, target_rows=None,
                               approx_recip=True):
    """x: (B, N, Din) float32.  prepared: output of prepare_params()."""
    B, N, Din = x.shape
    assert Din == prepared["din"]
    Dout = prepared["dout"]
    dpi, dpo = prepared["dpi"], prepared["dpo"]
    cdt = prepared["compute_dtype"]
    itm = cdt.itemsize

    vmem_cap = _vmem_capacity_bytes()
    if target_rows is None:
        # 64 MiB chips (v7x) get smaller tiles; 128 MiB chips (v5e/v6e) larger.
        target_rows = 512 if vmem_cap <= 64 * 2**20 else 2048

    # ---- pad token dim to the compute dtype's sublane multiple ----
    sub = 8 if itm == 4 else 16
    n_pad = _round_up(N, sub)

    bt = batch_tile if batch_tile is not None else _pick_batch_tile(B, n_pad, target_rows)
    b_pad = _round_up(B, bt)
    grid = (b_pad // bt,)

    # ---- pad input (batch, tokens, features) and cast MXU operand ----
    xp = jnp.pad(x, ((0, b_pad - B), (0, n_pad - N), (0, dpi - Din))).astype(cdt)

    kernel = functools.partial(
        _intra_node_agg_kernel,
        scale=1.0 / math.sqrt(Dout),                 # TRUE Dout, not padded
        dpad=dpo,
        n_true=N,
        approx_recip=approx_recip,
    )

    def const_spec(shape):
        nd = len(shape)
        # Constant index_map -> single-buffer the resident weight block.
        return pl.BlockSpec(shape, lambda b, nd=nd: (0,) * nd,
                            pipeline_mode=pl.Buffered(1))

    wp, bp = prepared["wp"], prepared["bp"]
    w1, b1 = prepared["w1"], prepared["b1"]
    w2, b2 = prepared["w2"], prepared["b2"]
    wqkv = prepared["wqkv"]

    param_bytes = int(sum(int(a.size) * a.dtype.itemsize
                          for a in (wp, bp, w1, b1, w2, b2, wqkv)))

    # ---- advisory cost estimate for the XLA scheduler ----
    rows_total = b_pad * n_pad
    flops = int(2 * rows_total * (dpi * dpo + 2 * dpo * dpo + 3 * dpo * dpo)
                + 4 * b_pad * n_pad * n_pad * dpo)
    cost = pl.CostEstimate(
        flops=flops,
        transcendentals=int(b_pad * n_pad * n_pad),
        bytes_accessed=int(xp.size * itm + param_bytes + rows_total * dpo * itm),
    )

    # ---- explicit scoped-VMEM budget, clamped below physical capacity ----
    rows = bt * n_pad
    vmem_est = param_bytes                           # single-buffered weights
    vmem_est += 2 * rows * dpi * itm                 # x block (double-buffered)
    vmem_est += 2 * rows * dpo * itm                 # out block (double-buffered)
    vmem_est += 2 * rows * dpo * 4                   # h / relu f32 temps
    vmem_est += rows * 3 * dpo * (4 + itm)           # qkv f32 + cast copies
    vmem_est += 2 * bt * n_pad * n_pad * 4           # scores + probs
    ceiling = int(0.75 * vmem_cap)                   # never the whole of VMEM
    vmem_limit = int(min(ceiling, max(32 * 2**20, 2 * vmem_est)))

    out_padded = pl.pallas_call(
        kernel,
        out_shape=jax.ShapeDtypeStruct((b_pad, n_pad, dpo), cdt),
        grid_spec=pltpu.PrefetchScalarGridSpec(
            num_scalar_prefetch=0,
            grid=grid,
            in_specs=[
                pl.BlockSpec((bt, n_pad, dpi), lambda b: (b, 0, 0)),  # X tile
                const_spec((dpi, dpo)),                               # wp
                const_spec((1, dpo)),                                 # bp
                const_spec((dpo, dpo)),                               # w1
                const_spec((1, dpo)),                                 # b1
                const_spec((dpo, dpo)),                               # w2
                const_spec((1, dpo)),                                 # b2
                const_spec((dpo, 3 * dpo)),                           # wqkv
            ],
            out_specs=pl.BlockSpec((bt, n_pad, dpo), lambda b: (b, 0, 0)),
        ),
        compiler_params=pltpu.CompilerParams(
            dimension_semantics=("parallel",),
            vmem_limit_bytes=vmem_limit,
        ),
        cost_estimate=cost,
    )(xp, wp, bp, w1, b1, w2, b2, wqkv)

    # strip batch/token/feature padding back to the true shape
    return out_padded[:B, :N, :Dout]


def _kaiming_uniform(key, fan_in, shape):
    # kaiming_uniform_ with nonlinearity='relu': gain = sqrt(2)
    gain = math.sqrt(2.0)
    bound = gain * math.sqrt(3.0 / fan_in)
    return jax.random.uniform(key, shape, jnp.float32, -bound, bound)


def make_params(key, input_dim, output_dim):
    """Synthetic parameters matching IntraNodeAggregator(input_dim, output_dim).

    PyTorch Linear stores weight as (out, in); generate that way then transpose
    to (in, out) so the kernel computes x @ W directly.  Biases zero-init
    (initialize_weights)."""
    keys = jax.random.split(key, 5)
    wp = _kaiming_uniform(keys[0], input_dim, (output_dim, input_dim))
    bp = jnp.zeros((1, output_dim), jnp.float32)
    w1 = _kaiming_uniform(keys[1], output_dim, (output_dim, output_dim))
    b1 = jnp.zeros((1, output_dim), jnp.float32)
    w2 = _kaiming_uniform(keys[2], output_dim, (output_dim, output_dim))
    b2 = jnp.zeros((1, output_dim), jnp.float32)
    wqkv = _kaiming_uniform(keys[3], output_dim, (3 * output_dim, output_dim))
    wq, wk, wv = (wqkv[:output_dim],
                  wqkv[output_dim:2 * output_dim],
                  wqkv[2 * output_dim:])
    return {
        "wp": wp.T, "bp": bp,
        "w1": w1.T, "b1": b1,
        "w2": w2.T, "b2": b2,
        "wq": wq.T, "wk": wk.T, "wv": wv.T,
    }


def reference_forward(x, params):
    """Pure-JAX f32 reference of the same forward pass."""
    h = x @ params["wp"] + params["bp"]
    h = jnp.maximum(h @ params["w1"] + params["b1"], 0.0)
    h = h @ params["w2"] + params["b2"]
    q = h @ params["wq"]
    k = h @ params["wk"]
    v = h @ params["wv"]
    scale = 1.0 / math.sqrt(q.shape[-1])
    s = jnp.einsum("bnd,bmd->bnm", q, k) * scale
    p = jax.nn.softmax(s, axis=-1)
    return jnp.einsum("bnm,bmd->bnd", p, v)


if __name__ == "__main__":
    B, N, Din, Dout = 2, 8, 16, 32

    key = jax.random.PRNGKey(0)
    kx, kp = jax.random.split(key)
    x = jax.random.normal(kx, (B, N, Din), jnp.float32)
    params = make_params(kp, Din, Dout)

    ref = reference_forward(x, params)

    # f32 compute path (exact reciprocal): tight check against the reference.
    prep_f32 = prepare_params(params, compute_dtype=jnp.float32)
    out_f32 = jax.block_until_ready(
        intra_node_aggregator_sdpa(x, prep_f32, approx_recip=False))
    assert out_f32.shape == (B, N, Dout)
    assert jnp.allclose(out_f32, ref, atol=1e-4, rtol=1e-4), "f32 mismatch vs reference"

    # bf16 operands + f32 accumulation + approx softmax reciprocal: looser check.
    # (On v5e, prefer this path: its MXU only reaches peak with bf16 operands.)
    prep_bf16 = prepare_params(params, compute_dtype=jnp.bfloat16)
    out_bf16 = jax.block_until_ready(
        intra_node_aggregator_sdpa(x, prep_bf16))
    rel_err = float(jnp.max(jnp.abs(out_bf16.astype(jnp.float32) - ref)) /
                    (jnp.max(jnp.abs(ref)) + 1e-6))
    assert rel_err < 5e-2, f"bf16 mismatch vs reference (rel err {rel_err})"

    print("KERNEL_OK")
</pallas_src>

<mosaic_0001>
module attributes {stable_mosaic.version = 11 : i64} {
  func.func @_intra_node_agg_kernel(%arg0: i32, %arg1: memref<1x8x128xf32, #tpu.memory_space<vmem>>, %arg2: memref<128x128xf32, #tpu.memory_space<vmem>>, %arg3: memref<1x128xf32, #tpu.memory_space<vmem>>, %arg4: memref<128x128xf32, #tpu.memory_space<vmem>>, %arg5: memref<1x128xf32, #tpu.memory_space<vmem>>, %arg6: memref<128x128xf32, #tpu.memory_space<vmem>>, %arg7: memref<1x128xf32, #tpu.memory_space<vmem>>, %arg8: memref<128x384xf32, #tpu.memory_space<vmem>>, %arg9: memref<1x8x128xf32, #tpu.memory_space<vmem>>) attributes {dimension_semantics = [#tpu.dimension_semantics<parallel>], iteration_bounds = array<i64: 2>, scalar_prefetch = 0 : i64, scratch_operands = 0 : i64, tpu.core_type = #tpu.core_type<tc>, window_params = [{transform_indices = @transform_0, window_bounds = array<i64: 1, 8, 128>}, {pipeline_mode = #tpu.pipeline_mode<synchronous>, transform_indices = @transform_1, window_bounds = array<i64: 128, 128>}, {pipeline_mode = #tpu.pipeline_mode<synchronous>, transform_indices = @transform_2, window_bounds = array<i64: 1, 128>}, {pipeline_mode = #tpu.pipeline_mode<synchronous>, transform_indices = @transform_3, window_bounds = array<i64: 128, 128>}, {pipeline_mode = #tpu.pipeline_mode<synchronous>, transform_indices = @transform_4, window_bounds = array<i64: 1, 128>}, {pipeline_mode = #tpu.pipeline_mode<synchronous>, transform_indices = @transform_5, window_bounds = array<i64: 128, 128>}, {pipeline_mode = #tpu.pipeline_mode<synchronous>, transform_indices = @transform_6, window_bounds = array<i64: 1, 128>}, {pipeline_mode = #tpu.pipeline_mode<synchronous>, transform_indices = @transform_7, window_bounds = array<i64: 128, 384>}, {transform_indices = @transform_8, window_bounds = array<i64: 1, 8, 128>}]} {
    %c0 = arith.constant 0 : index
    %c0_0 = arith.constant 0 : index
    %c0_1 = arith.constant 0 : index
    %0 = vector.load %arg1[%c0, %c0_0, %c0_1] : memref<1x8x128xf32, #tpu.memory_space<vmem>>, vector<1x8x128xf32>
    %1 = vector.shape_cast %0 : vector<1x8x128xf32> to vector<8x128xf32>
    %c0_2 = arith.constant 0 : index
    %c0_3 = arith.constant 0 : index
    %2 = vector.load %arg2[%c0_2, %c0_3] : memref<128x128xf32, #tpu.memory_space<vmem>>, vector<128x128xf32>
    %cst = arith.constant dense<0.000000e+00> : vector<8x128xf32>
    %3 = tpu.matmul %1, %2, %cst {dimension_numbers = #tpu.dot_dimension_numbers<[1], [0], [0], [1], [0, 0, 1, 1], [], []>} : vector<8x128xf32>, vector<128x128xf32>, vector<8x128xf32> -> vector<8x128xf32>
    %c0_4 = arith.constant 0 : index
    %c0_5 = arith.constant 0 : index
    %4 = vector.load %arg3[%c0_4, %c0_5] : memref<1x128xf32, #tpu.memory_space<vmem>>, vector<1x128xf32>
    %5 = vector.broadcast %4 : vector<1x128xf32> to vector<8x128xf32>
    %6 = arith.addf %3, %5 : vector<8x128xf32>
    %c0_6 = arith.constant 0 : index
    %c0_7 = arith.constant 0 : index
    %7 = vector.load %arg4[%c0_6, %c0_7] : memref<128x128xf32, #tpu.memory_space<vmem>>, vector<128x128xf32>
    %cst_8 = arith.constant dense<0.000000e+00> : vector<8x128xf32>
    %8 = tpu.matmul %6, %7, %cst_8 {dimension_numbers = #tpu.dot_dimension_numbers<[1], [0], [0], [1], [0, 0, 1, 1], [], []>} : vector<8x128xf32>, vector<128x128xf32>, vector<8x128xf32> -> vector<8x128xf32>
    %c0_9 = arith.constant 0 : index
    %c0_10 = arith.constant 0 : index
    %9 = vector.load %arg5[%c0_9, %c0_10] : memref<1x128xf32, #tpu.memory_space<vmem>>, vector<1x128xf32>
    %10 = vector.broadcast %9 : vector<1x128xf32> to vector<8x128xf32>
    %11 = arith.addf %8, %10 : vector<8x128xf32>
    %cst_11 = arith.constant 0.000000e+00 : f32
    %12 = vector.broadcast %cst_11 : f32 to vector<8x128xf32>
    %13 = arith.maximumf %11, %12 : vector<8x128xf32>
    %c0_12 = arith.constant 0 : index
    %c0_13 = arith.constant 0 : index
    %14 = vector.load %arg6[%c0_12, %c0_13] : memref<128x128xf32, #tpu.memory_space<vmem>>, vector<128x128xf32>
    %cst_14 = arith.constant dense<0.000000e+00> : vector<8x128xf32>
    %15 = tpu.matmul %13, %14, %cst_14 {dimension_numbers = #tpu.dot_dimension_numbers<[1], [0], [0], [1], [0, 0, 1, 1], [], []>} : vector<8x128xf32>, vector<128x128xf32>, vector<8x128xf32> -> vector<8x128xf32>
    %c0_15 = arith.constant 0 : index
    %c0_16 = arith.constant 0 : index
    %16 = vector.load %arg7[%c0_15, %c0_16] : memref<1x128xf32, #tpu.memory_space<vmem>>, vector<1x128xf32>
    %17 = vector.broadcast %16 : vector<1x128xf32> to vector<8x128xf32>
    %18 = arith.addf %15, %17 : vector<8x128xf32>
    %c0_17 = arith.constant 0 : index
    %c0_18 = arith.constant 0 : index
    %19 = vector.load %arg8[%c0_17, %c0_18] : memref<128x384xf32, #tpu.memory_space<vmem>>, vector<128x384xf32>
    %cst_19 = arith.constant dense<0.000000e+00> : vector<8x384xf32>
    %20 = tpu.matmul %18, %19, %cst_19 {dimension_numbers = #tpu.dot_dimension_numbers<[1], [0], [0], [1], [0, 0, 1, 1], [], []>} : vector<8x128xf32>, vector<128x384xf32>, vector<8x384xf32> -> vector<8x384xf32>
    %21 = vector.extract_strided_slice %20 {offsets = [0, 0], sizes = [8, 128], strides = [1, 1]} : vector<8x384xf32> to vector<8x128xf32>
    %22 = vector.shape_cast %21 : vector<8x128xf32> to vector<1x8x128xf32>
    %23 = vector.extract_strided_slice %20 {offsets = [0, 128], sizes = [8, 128], strides = [1, 1]} : vector<8x384xf32> to vector<8x128xf32>
    %24 = vector.shape_cast %23 : vector<8x128xf32> to vector<1x8x128xf32>
    %25 = vector.extract_strided_slice %20 {offsets = [0, 256], sizes = [8, 128], strides = [1, 1]} : vector<8x384xf32> to vector<8x128xf32>
    %26 = vector.shape_cast %25 : vector<8x128xf32> to vector<1x8x128xf32>
    %cst_20 = arith.constant dense<0.000000e+00> : vector<1x8x8xf32>
    %27 = tpu.matmul %22, %24, %cst_20 {dimension_numbers = #tpu.dot_dimension_numbers<[2], [2], [1], [1], [0, 0, 0, 1, 1, 1], [0], [0]>} : vector<1x8x128xf32>, vector<1x8x128xf32>, vector<1x8x8xf32> -> vector<1x8x8xf32>
    %cst_21 = arith.constant 0.176776692 : f32
    %28 = vector.broadcast %cst_21 : f32 to vector<1x8x8xf32>
    %29 = arith.mulf %27, %28 : vector<1x8x8xf32>
    %cst_22 = arith.constant dense<0xFF800000> : vector<1x8xf32>
    %30 = vector.multi_reduction <maximumf>, %29, %cst_22 [2] : vector<1x8x8xf32> to vector<1x8xf32>
    %31 = vector.shape_cast %30 : vector<1x8xf32> to vector<1x8x1xf32>
    %32 = vector.broadcast %31 : vector<1x8x1xf32> to vector<1x8x8xf32>
    %33 = arith.subf %29, %32 : vector<1x8x8xf32>
    %34 = math.exp %33 : vector<1x8x8xf32>
    %cst_23 = arith.constant dense<0.000000e+00> : vector<1x8xf32>
    %35 = vector.multi_reduction <add>, %34, %cst_23 [2] : vector<1x8x8xf32> to vector<1x8xf32>
    %36 = vector.shape_cast %35 : vector<1x8xf32> to vector<1x8x1xf32>
    %37 = tpu.reciprocal %36 : vector<1x8x1xf32> -> vector<1x8x1xf32>
    %38 = vector.broadcast %37 : vector<1x8x1xf32> to vector<1x8x8xf32>
    %39 = arith.mulf %34, %38 : vector<1x8x8xf32>
    %cst_24 = arith.constant dense<0.000000e+00> : vector<1x8x128xf32>
    %40 = tpu.matmul %39, %26, %cst_24 {dimension_numbers = #tpu.dot_dimension_numbers<[2], [1], [1], [2], [0, 0, 0, 1, 1, 2], [0], [0]>} : vector<1x8x8xf32>, vector<1x8x128xf32>, vector<1x8x128xf32> -> vector<1x8x128xf32>
    %c0_25 = arith.constant 0 : index
    %c0_26 = arith.constant 0 : index
    %c0_27 = arith.constant 0 : index
    %41 = vector.load %arg9[%c0_25, %c0_26, %c0_27] : memref<1x8x128xf32, #tpu.memory_space<vmem>>, vector<1x8x128xf32>
    tpu.vector_store %arg9[%c0_25, %c0_26, %c0_27], %40 {strides = array<i32>} : memref<1x8x128xf32, #tpu.memory_space<vmem>>, vector<1x8x128xf32>,
    return
  }
  func.func @transform_0(%arg0: i32) -> (i32, i32, i32) {
    %c0_i32 = arith.constant 0 : i32
    %c0_i32_0 = arith.constant 0 : i32
    %c0_i32_1 = arith.constant 0 : i32
    return %arg0, %c0_i32, %c0_i32_0 : i32, i32, i32
  }
  func.func @transform_1(%arg0: i32) -> (i32, i32) {
    %c0_i32 = arith.constant 0 : i32
    %c0_i32_0 = arith.constant 0 : i32
    %c0_i32_1 = arith.constant 0 : i32
    return %c0_i32, %c0_i32_0 : i32, i32
  }
  func.func @transform_2(%arg0: i32) -> (i32, i32) {
    %c0_i32 = arith.constant 0 : i32
    %c0_i32_0 = arith.constant 0 : i32
    %c0_i32_1 = arith.constant 0 : i32
    return %c0_i32, %c0_i32_0 : i32, i32
  }
  func.func @transform_3(%arg0: i32) -> (i32, i32) {
    %c0_i32 = arith.constant 0 : i32
    %c0_i32_0 = arith.constant 0 : i32
    %c0_i32_1 = arith.constant 0 : i32
    return %c0_i32, %c0_i32_0 : i32, i32
  }
  func.func @transform_4(%arg0: i32) -> (i32, i32) {
    %c0_i32 = arith.constant 0 : i32
    %c0_i32_0 = arith.constant 0 : i32
    %c0_i32_1 = arith.constant 0 : i32
    return %c0_i32, %c0_i32_0 : i32, i32
  }
  func.func @transform_5(%arg0: i32) -> (i32, i32) {
    %c0_i32 = arith.constant 0 : i32
    %c0_i32_0 = arith.constant 0 : i32
    %c0_i32_1 = arith.constant 0 : i32
    return %c0_i32, %c0_i32_0 : i32, i32
  }
  func.func @transform_6(%arg0: i32) -> (i32, i32) {
    %c0_i32 = arith.constant 0 : i32
    %c0_i32_0 = arith.constant 0 : i32
    %c0_i32_1 = arith.constant 0 : i32
    return %c0_i32, %c0_i32_0 : i32, i32
  }
  func.func @transform_7(%arg0: i32) -> (i32, i32) {
    %c0_i32 = arith.constant 0 : i32
    %c0_i32_0 = arith.constant 0 : i32
    %c0_i32_1 = arith.constant 0 : i32
    return %c0_i32, %c0_i32_0 : i32, i32
  }
  func.func @transform_8(%arg0: i32) -> (i32, i32, i32) {
    %c0_i32 = arith.constant 0 : i32
    %c0_i32_0 = arith.constant 0 : i32
    %c0_i32_1 = arith.constant 0 : i32
    return %arg0, %c0_i32, %c0_i32_0 : i32, i32, i32
  }
}

</mosaic_0001>

<llo_original>
// kernel: tpu_custom_call.1
$region0: #{tpu_custom_call.1}
  #allocation0 [shape = 'u32[]', space=smem, size = 0x4, offset = 0x4, fixed_abs, tag = 'smem constant byte address 0x4 - core index']
  #allocation1 [shape = 'u32[144,128]{1,0:T(1,128)}', space=vmem, size = 0x12000, scoped, tag = 'internal scratch']
  %s0 = inlined_call_operand.hbm [shape: f32[2,8,128], index: 0, kind: input, shape index: {}]
  %s1 = inlined_call_operand.hbm [shape: f32[128,128], index: 1, kind: input, shape index: {}]
  %s2 = inlined_call_operand.vmem [shape: f32[1,128], index: 2, kind: input, shape index: {}]
  %s3 = inlined_call_operand.hbm [shape: f32[128,128], index: 3, kind: input, shape index: {}]
  %s4 = inlined_call_operand.vmem [shape: f32[1,128], index: 4, kind: input, shape index: {}]
  %s5 = inlined_call_operand.hbm [shape: f32[128,128], index: 5, kind: input, shape index: {}]
  %s6 = inlined_call_operand.vmem [shape: f32[1,128], index: 6, kind: input, shape index: {}]
  %s7 = inlined_call_operand.hbm [shape: f32[128,384], index: 7, kind: input, shape index: {}]
  %s8 = inlined_call_operand.hbm [shape: f32[2,8,128], index: 8, kind: output, shape index: {}]
  %s9 = sld [smem:[#allocation0]]
  $region85: #{tpu_custom_call.1} parent=0
    _
  %s11 = ssub.s32 1, %s9
  %s12 = scalar_select 0, %s11, %s9
  $region1: #{tpu_custom_call.1} parent=0
    #allocation2 [shape = 'u8[8192]{0}', space=vmem, size = 0x2000, scoped, tag = 'input window, operand 0']
    #allocation3 [shape = 's32[2]{0}', space=sflag, size = 0x8, scoped, tag = 'scoped memory for tpu_custom_call.1']
    #allocation4 [shape = 's32[2]{0}', space=sflag, size = 0x8, scoped, tag = 'scoped memory for tpu_custom_call.1']
    #allocation5 [shape = 'u8[65536]{0}', space=vmem, size = 0x10000, scoped, tag = 'input window, operand 1, single buffered']
    #allocation6 [shape = 's32[1]{0}', space=sflag, size = 0x4, scoped, tag = 'scoped memory for tpu_custom_call.1']
    #allocation7 [shape = 'u8[65536]{0}', space=vmem, size = 0x10000, scoped, tag = 'input window, operand 3, single buffered']
    #allocation8 [shape = 'u8[65536]{0}', space=vmem, size = 0x10000, scoped, tag = 'input window, operand 5, single buffered']
    #allocation9 [shape = 's32[1]{0}', space=sflag, size = 0x4, scoped, tag = 'scoped memory for tpu_custom_call.1']
    #allocation10 [shape = 'u8[196608]{0}', space=vmem, size = 0x30000, scoped, tag = 'input window, operand 7, single buffered']
    #allocation11 [shape = 'u8[8192]{0}', space=vmem, size = 0x2000, scoped, tag = 'output window, operand 0']
    %13 = vsyncpa [#allocation3], 0
    %s14 = scalar_lea.sflag [#allocation3], 1
    %15 = vsyncpa %s14, 0
    %16 = vsyncpa [#allocation6], 0
    %17 = vsyncpa [#allocation9], 0
    %18 = vsyncpa [#allocation4], 0
    %s19 = scalar_lea.sflag [#allocation4], 1
    %20 = vsyncpa %s19, 0
    loop: start=0, step=1, limit=4
    $region2: #{tpu_custom_call.1} parent=1 // loop_pre_header
      _
    $region3: #{tpu_custom_call.1} parent=1 // loop_header
      %s22 = sphi 0, %s26
      %p23 = scmp.ge.s32.totalorder %s22, 4
      %s32 = sphi 0, %s34
      %s35 = sphi 0, %s32
      %s36 = sphi 0, %s35
      %s52 = sphi 0, %s36
      %s56 = sphi 0, %s56
      %s58 = sphi 0, %s56
      %s59 = sphi 0, %s58
      %s73 = sphi 0, %s59
      %s77 = sphi 0, %s77
      %s79 = sphi 0, %s77
      %s80 = sphi 0, %s79
      %s94 = sphi 0, %s80
      %s98 = sphi 0, %s98
      %s100 = sphi 0, %s98
      %s101 = sphi 0, %s100
      %s115 = sphi 0, %s101
      %s119 = sphi 0, %s119
      %s121 = sphi 0, %s119
      %s122 = sphi 0, %s121
      %s136 = sphi 0, %s122
      %s140 = sphi 0, %s140
      %s142 = sphi 0, %s140
      %s143 = sphi 0, %s142
      %s157 = sphi 0, %s143
      %s161 = sphi 0, %s161
      %s163 = sphi 0, %s161
      %s164 = sphi 0, %s163
      %s178 = sphi 0, %s164
      %s182 = sphi 0, %s182
      %s184 = sphi 0, %s182
      %s185 = sphi 0, %s184
      %s199 = sphi 0, %s185
      %s205 = sphi 0, %s207
      %s208 = sphi 0, %s205
      %s209 = sphi 0, %s208
      %s225 = sphi 0, %s209
    $region4: #{tpu_custom_call.1} parent=1 // loop_header_branch
      %25 = sbr.rel (%p23) target = $region8
    $region5: #{tpu_custom_call.1} parent=1 // loop_body
      %s27 = ssub.s32 %s22, 1
      %s28 = ssub.s32 %s22, 2
      %s29 = sadd.s32 %s22, 1
      %s30 = ssub.s32 %s22, %s29
      %p31 = scmp.eq.s32.totalorder %s30, 0
      %s33 = sadd.s32 %s32, 1
      %s34 = scalar_select %p31, %s32, %s33
      %p37 = pneg %p31
      %p38 = scmp.eq.s32.totalorder %s22, 1
      %p39 = por %p37, %p38
      %p40 = scmp.ne.s32.totalorder %s32, %s35
      %p41 = scmp.eq.s32.totalorder %s22, 0
      %p42 = por %p40, %p41
      %p43 = scmp.ne.s32.totalorder %s32, %s35
      %p44 = scmp.eq.s32.totalorder %s27, 1
      %p45 = por %p43, %p44
      %p46 = scmp.ne.s32.totalorder %s35, %s36
      %p47 = scmp.eq.s32.totalorder %s27, 0
      %p48 = por %p46, %p47
      %p49 = scmp.ne.s32.totalorder %s35, %s36
      %p50 = scmp.eq.s32.totalorder %s28, 1
      %p51 = por %p49, %p50
      %p53 = scmp.ne.s32.totalorder %s36, %s52
      %p54 = scmp.eq.s32.totalorder %s28, 0
      %p55 = por %p53, %p54
      %s57 = sadd.s32 %s56, 1
      %p60 = scmp.eq.s32.totalorder %s22, 1
      %p61 = scmp.ne.s32.totalorder %s56, %s58
      %p62 = scmp.eq.s32.totalorder %s22, 0
      %p63 = por %p61, %p62
      %p64 = scmp.ne.s32.totalorder %s56, %s58
      %p65 = scmp.eq.s32.totalorder %s27, 1
      %p66 = por %p64, %p65
      %p67 = scmp.ne.s32.totalorder %s58, %s59
      %p68 = scmp.eq.s32.totalorder %s27, 0
      %p69 = por %p67, %p68
      %p70 = scmp.ne.s32.totalorder %s58, %s59
      %p71 = scmp.eq.s32.totalorder %s28, 1
      %p72 = por %p70, %p71
      %p74 = scmp.ne.s32.totalorder %s59, %s73
      %p75 = scmp.eq.s32.totalorder %s28, 0
      %p76 = por %p74, %p75
      %s78 = sadd.s32 %s77, 1
      %p81 = scmp.eq.s32.totalorder %s22, 1
      %p82 = scmp.ne.s32.totalorder %s77, %s79
      %p83 = scmp.eq.s32.totalorder %s22, 0
      %p84 = por %p82, %p83
      %p85 = scmp.ne.s32.totalorder %s77, %s79
      %p86 = scmp.eq.s32.totalorder %s27, 1
      %p87 = por %p85, %p86
      %p88 = scmp.ne.s32.totalorder %s79, %s80
      %p89 = scmp.eq.s32.totalorder %s27, 0
      %p90 = por %p88, %p89
      %p91 = scmp.ne.s32.totalorder %s79, %s80
      %p92 = scmp.eq.s32.totalorder %s28, 1
      %p93 = por %p91, %p92
      %p95 = scmp.ne.s32.totalorder %s80, %s94
      %p96 = scmp.eq.s32.totalorder %s28, 0
      %p97 = por %p95, %p96
      %s99 = sadd.s32 %s98, 1
      %p102 = scmp.eq.s32.totalorder %s22, 1
      %p103 = scmp.ne.s32.totalorder %s98, %s100
      %p104 = scmp.eq.s32.totalorder %s22, 0
      %p105 = por %p103, %p104
      %p106 = scmp.ne.s32.totalorder %s98, %s100
      %p107 = scmp.eq.s32.totalorder %s27, 1
      %p108 = por %p106, %p107
      %p109 = scmp.ne.s32.totalorder %s100, %s101
      %p110 = scmp.eq.s32.totalorder %s27, 0
      %p111 = por %p109, %p110
      %p112 = scmp.ne.s32.totalorder %s100, %s101
      %p113 = scmp.eq.s32.totalorder %s28, 1
      %p114 = por %p112, %p113
      %p116 = scmp.ne.s32.totalorder %s101, %s115
      %p117 = scmp.eq.s32.totalorder %s28, 0
      %p118 = por %p116, %p117
      %s120 = sadd.s32 %s119, 1
      %p123 = scmp.eq.s32.totalorder %s22, 1
      %p124 = scmp.ne.s32.totalorder %s119, %s121
      %p125 = scmp.eq.s32.totalorder %s22, 0
      %p126 = por %p124, %p125
      %p127 = scmp.ne.s32.totalorder %s119, %s121
      %p128 = scmp.eq.s32.totalorder %s27, 1
      %p129 = por %p127, %p128
      %p130 = scmp.ne.s32.totalorder %s121, %s122
      %p131 = scmp.eq.s32.totalorder %s27, 0
      %p132 = por %p130, %p131
      %p133 = scmp.ne.s32.totalorder %s121, %s122
      %p134 = scmp.eq.s32.totalorder %s28, 1
      %p135 = por %p133, %p134
      %p137 = scmp.ne.s32.totalorder %s122, %s136
      %p138 = scmp.eq.s32.totalorder %s28, 0
      %p139 = por %p137, %p138
      %s141 = sadd.s32 %s140, 1
      %p144 = scmp.eq.s32.totalorder %s22, 1
      %p145 = scmp.ne.s32.totalorder %s140, %s142
      %p146 = scmp.eq.s32.totalorder %s22, 0
      %p147 = por %p145, %p146
      %p148 = scmp.ne.s32.totalorder %s140, %s142
      %p149 = scmp.eq.s32.totalorder %s27, 1
      %p150 = por %p148, %p149
      %p151 = scmp.ne.s32.totalorder %s142, %s143
      %p152 = scmp.eq.s32.totalorder %s27, 0
      %p153 = por %p151, %p152
      %p154 = scmp.ne.s32.totalorder %s142, %s143
      %p155 = scmp.eq.s32.totalorder %s28, 1
      %p156 = por %p154, %p155
      %p158 = scmp.ne.s32.totalorder %s143, %s157
      %p159 = scmp.eq.s32.totalorder %s28, 0
      %p160 = por %p158, %p159
      %s162 = sadd.s32 %s161, 1
      %p165 = scmp.eq.s32.totalorder %s22, 1
      %p166 = scmp.ne.s32.totalorder %s161, %s163
      %p167 = scmp.eq.s32.totalorder %s22, 0
      %p168 = por %p166, %p167
      %p169 = scmp.ne.s32.totalorder %s161, %s163
      %p170 = scmp.eq.s32.totalorder %s27, 1
      %p171 = por %p169, %p170
      %p172 = scmp.ne.s32.totalorder %s163, %s164
      %p173 = scmp.eq.s32.totalorder %s27, 0
      %p174 = por %p172, %p173
      %p175 = scmp.ne.s32.totalorder %s163, %s164
      %p176 = scmp.eq.s32.totalorder %s28, 1
      %p177 = por %p175, %p176
      %p179 = scmp.ne.s32.totalorder %s164, %s178
      %p180 = scmp.eq.s32.totalorder %s28, 0
      %p181 = por %p179, %p180
      %s183 = sadd.s32 %s182, 1
      %p186 = scmp.eq.s32.totalorder %s22, 1
      %p187 = scmp.ne.s32.totalorder %s182, %s184
      %p188 = scmp.eq.s32.totalorder %s22, 0
      %p189 = por %p187, %p188
      %p190 = scmp.ne.s32.totalorder %s182, %s184
      %p191 = scmp.eq.s32.totalorder %s27, 1
      %p192 = por %p190, %p191
      %p193 = scmp.ne.s32.totalorder %s184, %s185
      %p194 = scmp.eq.s32.totalorder %s27, 0
      %p195 = por %p193, %p194
      %p196 = scmp.ne.s32.totalorder %s184, %s185
      %p197 = scmp.eq.s32.totalorder %s28, 1
      %p198 = por %p196, %p197
      %p200 = scmp.ne.s32.totalorder %s185, %s199
      %p201 = scmp.eq.s32.totalorder %s28, 0
      %p202 = por %p200, %p201
      %s203 = ssub.s32 %s22, %s29
      %p204 = scmp.eq.s32.totalorder %s203, 0
      %s206 = sadd.s32 %s205, 1
      %s207 = scalar_select %p204, %s205, %s206
      %p210 = pneg %p204
      %p211 = scmp.eq.s32.totalorder %s22, 1
      %p212 = por %p210, %p211
      %p213 = scmp.ne.s32.totalorder %s205, %s208
      %p214 = scmp.eq.s32.totalorder %s22, 0
      %p215 = por %p213, %p214
      %p216 = scmp.ne.s32.totalorder %s205, %s208
      %p217 = scmp.eq.s32.totalorder %s27, 1
      %p218 = por %p216, %p217
      %p219 = scmp.ne.s32.totalorder %s208, %s209
      %p220 = scmp.eq.s32.totalorder %s27, 0
      %p221 = por %p219, %p220
      %p222 = scmp.ne.s32.totalorder %s208, %s209
      %p223 = scmp.eq.s32.totalorder %s28, 1
      %p224 = por %p222, %p223
      %p226 = scmp.ne.s32.totalorder %s209, %s225
      %p227 = scmp.eq.s32.totalorder %s28, 0
      %p228 = por %p226, %p227
      %p229 = scmp.le.s32.totalorder 1, %s22
      %p230 = scmp.lt.s32.totalorder %s22, 3
      %p231 = pnand %p229, %p230
      %p232 = pneg %p231
      // Predicated region
      $region9: #{tpu_custom_call.1} parent=5 // pred_check
        _
      $region10: #{tpu_custom_call.1} parent=5 // pred_check_branch
        %234 = sbr.rel (%p231) target = $region12
      $region11: #{tpu_custom_call.1} parent=5 // pred_region
        %s235 = ssub.s32 %s22, 1
        // Predicated region
        $region13: #{tpu_custom_call.1} parent=11 // pred_check
          %p236 = pneg %p69
        $region14: #{tpu_custom_call.1} parent=11 // pred_check_branch
          %238 = sbr.rel (%p236) target = $region16
        $region15: #{tpu_custom_call.1} parent=11 // pred_region
          %s240 = ssub.s32 2048, 2048
          %241 = vsyncadd [#allocation6], %s240
          %s242 = sshll.u32 [#allocation5], 4
          %s243 = int_to_ptr.vmem [resolvable:$true] %s242
          %248 = dma.hbm_to_vmem [thread:$0]  %s1, 2048, %s243, [#allocation6], 128, 128, 8
        $region16: #{tpu_custom_call.1} parent=11 // pred_fallthru
          _
        // Predicated region
        $region17: #{tpu_custom_call.1} parent=11 // pred_check
          %p249 = pneg %p90
        $region18: #{tpu_custom_call.1} parent=11 // pred_check_branch
          %251 = sbr.rel (%p249) target = $region20
        $region19: #{tpu_custom_call.1} parent=11 // pred_region
          _
        $region20: #{tpu_custom_call.1} parent=11 // pred_fallthru
          _
        // Predicated region
        $region21: #{tpu_custom_call.1} parent=11 // pred_check
          %p252 = pneg %p111
        $region22: #{tpu_custom_call.1} parent=11 // pred_check_branch
          %254 = sbr.rel (%p252) target = $region24
        $region23: #{tpu_custom_call.1} parent=11 // pred_region
          %s256 = ssub.s32 2048, 2048
          %257 = vsyncadd [#allocation6], %s256
          %s258 = sshll.u32 [#allocation7], 4
          %s259 = int_to_ptr.vmem [resolvable:$true] %s258
          %264 = dma.hbm_to_vmem [thread:$0]  %s3, 2048, %s259, [#allocation6], 128, 128, 8
        $region24: #{tpu_custom_call.1} parent=11 // pred_fallthru
          _
        // Predicated region
        $region25: #{tpu_custom_call.1} parent=11 // pred_check
          %p265 = pneg %p132
        $region26: #{tpu_custom_call.1} parent=11 // pred_check_branch
          %267 = sbr.rel (%p265) target = $region28
        $region27: #{tpu_custom_call.1} parent=11 // pred_region
          _
        $region28: #{tpu_custom_call.1} parent=11 // pred_fallthru
          _
        // Predicated region
        $region29: #{tpu_custom_call.1} parent=11 // pred_check
          %p268 = pneg %p153
        $region30: #{tpu_custom_call.1} parent=11 // pred_check_branch
          %270 = sbr.rel (%p268) target = $region32
        $region31: #{tpu_custom_call.1} parent=11 // pred_region
          %s272 = ssub.s32 2048, 2048
          %273 = vsyncadd [#allocation9], %s272
          %s274 = sshll.u32 [#allocation8], 4
          %s275 = int_to_ptr.vmem [resolvable:$true] %s274
          %280 = dma.hbm_to_vmem [thread:$0]  %s5, 2048, %s275, [#allocation9], 128, 128, 8
        $region32: #{tpu_custom_call.1} parent=11 // pred_fallthru
          _
        // Predicated region
        $region33: #{tpu_custom_call.1} parent=11 // pred_check
          %p281 = pneg %p174
        $region34: #{tpu_custom_call.1} parent=11 // pred_check_branch
          %283 = sbr.rel (%p281) target = $region36
        $region35: #{tpu_custom_call.1} parent=11 // pred_region
          _
        $region36: #{tpu_custom_call.1} parent=11 // pred_fallthru
          _
        // Predicated region
        $region37: #{tpu_custom_call.1} parent=11 // pred_check
          %p284 = pneg %p195
        $region38: #{tpu_custom_call.1} parent=11 // pred_check_branch
          %286 = sbr.rel (%p284) target = $region40
        $region39: #{tpu_custom_call.1} parent=11 // pred_region
          %s288 = ssub.s32 6144, 6144
          %289 = vsyncadd [#allocation9], %s288
          %s290 = sshll.u32 [#allocation10], 4
          %s291 = int_to_ptr.vmem [resolvable:$true] %s290
          %296 = dma.hbm_to_vmem [thread:$0]  %s7, 6144, %s291, [#allocation9], 384, 384, 24
        $region40: #{tpu_custom_call.1} parent=11 // pred_fallthru
          _
      $region12: #{tpu_custom_call.1} parent=5 // pred_fallthru
        _
      %p297 = scmp.lt.s32.totalorder %s22, 2
      // Predicated region
      $region41: #{tpu_custom_call.1} parent=5 // pred_check
        %p298 = pneg %p297
      $region42: #{tpu_custom_call.1} parent=5 // pred_check_branch
        %300 = sbr.rel (%p298) target = $region44
      $region43: #{tpu_custom_call.1} parent=5 // pred_region
        // Predicated region
        $region45: #{tpu_custom_call.1} parent=43 // pred_check
          %p301 = pneg %p42
        $region46: #{tpu_custom_call.1} parent=43 // pred_check_branch
          %303 = sbr.rel (%p301) target = $region48
        $region47: #{tpu_custom_call.1} parent=43 // pred_region
          %s304 = sand.u32 %s32, 1
          %s305 = scalar_lea.sflag [#allocation3], %s304
          %s306 = sand.u32 %s32, 1
          %s307 = smul.addr %s306, 8
          %s308 = scalar_lea.vmem [#allocation2], %s307
          %s310 = ssub.s32 128, 128
          %311 = vsyncadd %s305, %s310
          %s312 = smul.addr %s22, 128
          %s313 = scalar_lea.hbm %s0, %s312
          %s315 = sshll.u32 %s308, 4
          %s316 = int_to_ptr.vmem [resolvable:$true] %s315
          %318 = dma.hbm_to_vmem [thread:$0]  %s313, 128, %s316, %s305
        $region48: #{tpu_custom_call.1} parent=43 // pred_fallthru
          _
      $region44: #{tpu_custom_call.1} parent=5 // pred_fallthru
        _
      %p319 = scmp.le.s32.totalorder 1, %s22
      %p320 = scmp.lt.s32.totalorder %s22, 3
      %p321 = pnand %p319, %p320
      %p322 = pneg %p321
      // Predicated region
      $region49: #{tpu_custom_call.1} parent=5 // pred_check
        _
      $region50: #{tpu_custom_call.1} parent=5 // pred_check_branch
        %324 = sbr.rel (%p321) target = $region52
      $region51: #{tpu_custom_call.1} parent=5 // pred_region
        %s325 = ssub.s32 %s22, 1
        %s326 = sand.u32 %s35, 1
        %s327 = scalar_lea.sflag [#allocation3], %s326
        %s328 = sand.u32 %s35, 1
        %s329 = smul.addr %s328, 8
        %s330 = scalar_lea.vmem [#allocation2], %s329
        // Predicated region
        $region53: #{tpu_custom_call.1} parent=51 // pred_check
          %p331 = pneg %p48
        $region54: #{tpu_custom_call.1} parent=51 // pred_check_branch
          %333 = sbr.rel (%p331) target = $region56
        $region55: #{tpu_custom_call.1} parent=51 // pred_region
          %334 = dma.done %s327, 128
        $region56: #{tpu_custom_call.1} parent=51 // pred_fallthru
          _
        // Predicated region
        $region57: #{tpu_custom_call.1} parent=51 // pred_check
          %p335 = pneg %p69
        $region58: #{tpu_custom_call.1} parent=51 // pred_check_branch
          %337 = sbr.rel (%p335) target = $region60
        $region59: #{tpu_custom_call.1} parent=51 // pred_region
          %338 = dma.done [#allocation6], 2048
        $region60: #{tpu_custom_call.1} parent=51 // pred_fallthru
          _
        // Predicated region
        $region61: #{tpu_custom_call.1} parent=51 // pred_check
          %p339 = pneg %p111
        $region62: #{tpu_custom_call.1} parent=51 // pred_check_branch
          %341 = sbr.rel (%p339) target = $region64
        $region63: #{tpu_custom_call.1} parent=51 // pred_region
          %342 = dma.done [#allocation6], 2048
        $region64: #{tpu_custom_call.1} parent=51 // pred_fallthru
          _
        // Predicated region
        $region65: #{tpu_custom_call.1} parent=51 // pred_check
          %p343 = pneg %p153
        $region66: #{tpu_custom_call.1} parent=51 // pred_check_branch
          %345 = sbr.rel (%p343) target = $region68
        $region67: #{tpu_custom_call.1} parent=51 // pred_region
          %346 = dma.done [#allocation9], 2048
        $region68: #{tpu_custom_call.1} parent=51 // pred_fallthru
          _
        // Predicated region
        $region69: #{tpu_custom_call.1} parent=51 // pred_check
          %p347 = pneg %p195
        $region70: #{tpu_custom_call.1} parent=51 // pred_check_branch
          %349 = sbr.rel (%p347) target = $region72
        $region71: #{tpu_custom_call.1} parent=51 // pred_region
          %350 = dma.done [#allocation9], 6144
        $region72: #{tpu_custom_call.1} parent=51 // pred_fallthru
          _
        %s351 = sand.u32 %s35, 1
        %s352 = scalar_lea.sflag [#allocation3], %s351
        %s353 = sand.u32 %s35, 1
        %s354 = smul.addr %s353, 8
        %s355 = scalar_lea.vmem [#allocation2], %s354
        %p356 = pneg %p48
        %p357 = pneg %p45
        %p358 = pneg %p69
        %p359 = pneg %p66
        %p360 = pneg %p90
        %p361 = pneg %p87
        %p362 = pneg %p111
        %p363 = pneg %p108
        %p364 = pneg %p132
        %p365 = pneg %p129
        %p366 = pneg %p153
        %p367 = pneg %p150
        %p368 = pneg %p174
        %p369 = pneg %p171
        %p370 = pneg %p195
        %p371 = pneg %p192
        %p372 = pneg %p221
        %p373 = pneg %p218
        %s374 = sand.u32 %s208, 1
        %s375 = scalar_lea.sflag [#allocation4], %s374
        %s376 = sand.u32 %s208, 1
        %s377 = smul.addr %s376, 8
        %s378 = scalar_lea.vmem [#allocation11], %s377
        %v379 = vld [vmem:[%s330] sm:$0xff]
        %v380 = vld [vmem:[#allocation5] sm:$0xff]
        %v381 = vld [vmem:[#allocation5 + $0x8] sm:$0xff]
        %v382 = vld [vmem:[#allocation5 + $0x10] sm:$0xff]
        %v383 = vld [vmem:[#allocation5 + $0x18] sm:$0xff]
        %v384 = vld [vmem:[#allocation5 + $0x20] sm:$0xff]
        %v385 = vld [vmem:[#allocation5 + $0x28] sm:$0xff]
        %v386 = vld [vmem:[#allocation5 + $0x30] sm:$0xff]
        %v387 = vld [vmem:[#allocation5 + $0x38] sm:$0xff]
        %v388 = vld [vmem:[#allocation5 + $0x40] sm:$0xff]
        %v389 = vld [vmem:[#allocation5 + $0x48] sm:$0xff]
        %v390 = vld [vmem:[#allocation5 + $0x50] sm:$0xff]
        %v391 = vld [vmem:[#allocation5 + $0x58] sm:$0xff]
        %v392 = vld [vmem:[#allocation5 + $0x60] sm:$0xff]
        %v393 = vld [vmem:[#allocation5 + $0x68] sm:$0xff]
        %v394 = vld [vmem:[#allocation5 + $0x70] sm:$0xff]
        %v395 = vld [vmem:[#allocation5 + $0x78] sm:$0xff]
        %v396 = vld [vmem:[%s2] sm:$0x1]
        %v398 = vlaneseq
        %v399 = vshrl.u32 %v398, 7
        %v400 = vsub.s32 0, %v399
        %v401 = vrot.slane %v396, %v400
        %403 = vmatprep.subr.mxu0 0.0
        %404 = vmatpush1.msra.mxu0 %v395
        %405 = vmatprep.subr.mxu0 0.0
        %406 = vmatpush1.msra.mxu0 %v394
        %407 = vmatprep.subr.mxu0 0.0
        %408 = vmatpush1.msra.mxu0 %v393
        %409 = vmatprep.subr.mxu0 0.0
        %410 = vmatpush1.msra.mxu0 %v392
        %411 = vmatprep.subr.mxu0 0.0
        %412 = vmatpush1.msra.mxu0 %v391
        %413 = vmatprep.subr.mxu0 0.0
        %414 = vmatpush1.msra.mxu0 %v390
        %415 = vmatprep.subr.mxu0 0.0
        %416 = vmatpush1.msra.mxu0 %v389
        %417 = vmatprep.subr.mxu0 0.0
        %418 = vmatpush1.msra.mxu0 %v388
        %419 = vmatprep.subr.mxu0 0.0
        %420 = vmatpush1.msra.mxu0 %v387
        %421 = vmatprep.subr.mxu0 0.0
        %422 = vmatpush1.msra.mxu0 %v386
        %423 = vmatprep.subr.mxu0 0.0
        %424 = vmatpush1.msra.mxu0 %v385
        %425 = vmatprep.subr.mxu0 0.0
        %426 = vmatpush1.msra.mxu0 %v384
        %427 = vmatprep.subr.mxu0 0.0
        %428 = vmatpush1.msra.mxu0 %v383
        %429 = vmatprep.subr.mxu0 0.0
        %430 = vmatpush1.msra.mxu0 %v382
        %431 = vmatprep.subr.mxu0 0.0
        %432 = vmatpush1.msra.mxu0 %v381
        %433 = vmatprep.subr.mxu0 0.0
        %434 = vmatpush1.msra.mxu0 %v380
        %435 = vmatprep.subr.mxu0 0.0
        %436 = vmatpush2.msra.mxu0 0.0
        %437 = vmatprep.subr.mxu0 0.0
        %438 = vmatpush2.msra.mxu0 0.0
        %439 = vmatprep.subr.mxu0 0.0
        %440 = vmatpush2.msra.mxu0 0.0
        %441 = vmatprep.subr.mxu0 0.0
        %442 = vmatpush2.msra.mxu0 0.0
        %443 = vmatprep.subr.mxu0 0.0
        %444 = vmatpush2.msra.mxu0 0.0
        %445 = vmatprep.subr.mxu0 0.0
        %446 = vmatpush2.msra.mxu0 0.0
        %447 = vmatprep.subr.mxu0 0.0
        %448 = vmatpush2.msra.mxu0 0.0
        %449 = vmatprep.subr.mxu0 0.0
        %450 = vmatpush2.msra.mxu0 0.0
        %451 = vmatprep.subr.mxu0 0.0
        %452 = vmatpush2.msra.mxu0 0.0
        %453 = vmatprep.subr.mxu0 0.0
        %454 = vmatpush2.msra.mxu0 0.0
        %455 = vmatprep.subr.mxu0 0.0
        %456 = vmatpush2.msra.mxu0 0.0
        %457 = vmatprep.subr.mxu0 0.0
        %458 = vmatpush2.msra.mxu0 0.0
        %459 = vmatprep.subr.mxu0 0.0
        %460 = vmatpush2.msra.mxu0 0.0
        %461 = vmatprep.subr.mxu0 0.0
        %462 = vmatpush2.msra.mxu0 0.0
        %463 = vmatprep.subr.mxu0 0.0
        %464 = vmatpush2.msra.mxu0 0.0
        %465 = vmatprep.subr.mxu0 0.0
        %466 = vmatpush2.msra.mxu0 0.0
        %467 = vmatprep.mubr.f32.mxu0 0.0
        %468 = vmatmul.mubr.f32.gmra.mxu0 %v379
        %v469 = vpop.f32.mrf.mxu0
        %v470 = vadd.f32 %v401, %v469
        %v471 = vpop.f32.mrf.mxu0
        %472 = vdwg.mxu0
        %v473 = vld [vmem:[#allocation7] sm:$0xff]
        %v474 = vld [vmem:[#allocation7 + $0x8] sm:$0xff]
        %v475 = vld [vmem:[#allocation7 + $0x10] sm:$0xff]
        %v476 = vld [vmem:[#allocation7 + $0x18] sm:$0xff]
        %v477 = vld [vmem:[#allocation7 + $0x20] sm:$0xff]
        %v478 = vld [vmem:[#allocation7 + $0x28] sm:$0xff]
        %v479 = vld [vmem:[#allocation7 + $0x30] sm:$0xff]
        %v480 = vld [vmem:[#allocation7 + $0x38] sm:$0xff]
        %v481 = vld [vmem:[#allocation7 + $0x40] sm:$0xff]
        %v482 = vld [vmem:[#allocation7 + $0x48] sm:$0xff]
        %v483 = vld [vmem:[#allocation7 + $0x50] sm:$0xff]
        %v484 = vld [vmem:[#allocation7 + $0x58] sm:$0xff]
        %v485 = vld [vmem:[#allocation7 + $0x60] sm:$0xff]
        %v486 = vld [vmem:[#allocation7 + $0x68] sm:$0xff]
        %v487 = vld [vmem:[#allocation7 + $0x70] sm:$0xff]
        %v488 = vld [vmem:[#allocation7 + $0x78] sm:$0xff]
        %v489 = vld [vmem:[%s4] sm:$0x1]
        %v491 = vlaneseq
        %v492 = vshrl.u32 %v491, 7
        %v493 = vsub.s32 0, %v492
        %v494 = vrot.slane %v489, %v493
        %496 = vmatprep.subr.mxu0 0.0
        %497 = vmatpush1.msra.mxu0 %v488
        %498 = vmatprep.subr.mxu0 0.0
        %499 = vmatpush1.msra.mxu0 %v487
        %500 = vmatprep.subr.mxu0 0.0
        %501 = vmatpush1.msra.mxu0 %v486
        %502 = vmatprep.subr.mxu0 0.0
        %503 = vmatpush1.msra.mxu0 %v485
        %504 = vmatprep.subr.mxu0 0.0
        %505 = vmatpush1.msra.mxu0 %v484
        %506 = vmatprep.subr.mxu0 0.0
        %507 = vmatpush1.msra.mxu0 %v483
        %508 = vmatprep.subr.mxu0 0.0
        %509 = vmatpush1.msra.mxu0 %v482
        %510 = vmatprep.subr.mxu0 0.0
        %511 = vmatpush1.msra.mxu0 %v481
        %512 = vmatprep.subr.mxu0 0.0
        %513 = vmatpush1.msra.mxu0 %v480
        %514 = vmatprep.subr.mxu0 0.0
        %515 = vmatpush1.msra.mxu0 %v479
        %516 = vmatprep.subr.mxu0 0.0
        %517 = vmatpush1.msra.mxu0 %v478
        %518 = vmatprep.subr.mxu0 0.0
        %519 = vmatpush1.msra.mxu0 %v477
        %520 = vmatprep.subr.mxu0 0.0
        %521 = vmatpush1.msra.mxu0 %v476
        %522 = vmatprep.subr.mxu0 0.0
        %523 = vmatpush1.msra.mxu0 %v475
        %524 = vmatprep.subr.mxu0 0.0
        %525 = vmatpush1.msra.mxu0 %v474
        %526 = vmatprep.subr.mxu0 0.0
        %527 = vmatpush1.msra.mxu0 %v473
        %528 = vmatprep.subr.mxu0 0.0
        %529 = vmatpush2.msra.mxu0 0.0
        %530 = vmatprep.subr.mxu0 0.0
        %531 = vmatpush2.msra.mxu0 0.0
        %532 = vmatprep.subr.mxu0 0.0
        %533 = vmatpush2.msra.mxu0 0.0
        %534 = vmatprep.subr.mxu0 0.0
        %535 = vmatpush2.msra.mxu0 0.0
        %536 = vmatprep.subr.mxu0 0.0
        %537 = vmatpush2.msra.mxu0 0.0
        %538 = vmatprep.subr.mxu0 0.0
        %539 = vmatpush2.msra.mxu0 0.0
        %540 = vmatprep.subr.mxu0 0.0
        %541 = vmatpush2.msra.mxu0 0.0
        %542 = vmatprep.subr.mxu0 0.0
        %543 = vmatpush2.msra.mxu0 0.0
        %544 = vmatprep.subr.mxu0 0.0
        %545 = vmatpush2.msra.mxu0 0.0
        %546 = vmatprep.subr.mxu0 0.0
        %547 = vmatpush2.msra.mxu0 0.0
        %548 = vmatprep.subr.mxu0 0.0
        %549 = vmatpush2.msra.mxu0 0.0
        %550 = vmatprep.subr.mxu0 0.0
        %551 = vmatpush2.msra.mxu0 0.0
        %552 = vmatprep.subr.mxu0 0.0
        %553 = vmatpush2.msra.mxu0 0.0
        %554 = vmatprep.subr.mxu0 0.0
        %555 = vmatpush2.msra.mxu0 0.0
        %556 = vmatprep.subr.mxu0 0.0
        %557 = vmatpush2.msra.mxu0 0.0
        %558 = vmatprep.subr.mxu0 0.0
        %559 = vmatpush2.msra.mxu0 0.0
        %560 = vmatprep.mubr.f32.mxu0 0.0
        %561 = vmatmul.mubr.f32.gmra.mxu0 %v470
        %v562 = vpop.f32.mrf.mxu0
        %v563 = vadd.f32 %v494, %v562
        %v564 = vpop.f32.mrf.mxu0
        %565 = vdwg.mxu0
        %v566 = vmax.f32 %v563, 0.0
        %v567 = vld [vmem:[#allocation8] sm:$0xff]
        %v568 = vld [vmem:[#allocation8 + $0x8] sm:$0xff]
        %v569 = vld [vmem:[#allocation8 + $0x10] sm:$0xff]
        %v570 = vld [vmem:[#allocation8 + $0x18] sm:$0xff]
        %v571 = vld [vmem:[#allocation8 + $0x20] sm:$0xff]
        %v572 = vld [vmem:[#allocation8 + $0x28] sm:$0xff]
        %v573 = vld [vmem:[#allocation8 + $0x30] sm:$0xff]
        %v574 = vld [vmem:[#allocation8 + $0x38] sm:$0xff]
        %v575 = vld [vmem:[#allocation8 + $0x40] sm:$0xff]
        %v576 = vld [vmem:[#allocation8 + $0x48] sm:$0xff]
        %v577 = vld [vmem:[#allocation8 + $0x50] sm:$0xff]
        %v578 = vld [vmem:[#allocation8 + $0x58] sm:$0xff]
        %v579 = vld [vmem:[#allocation8 + $0x60] sm:$0xff]
        %v580 = vld [vmem:[#allocation8 + $0x68] sm:$0xff]
        %v581 = vld [vmem:[#allocation8 + $0x70] sm:$0xff]
        %v582 = vld [vmem:[#allocation8 + $0x78] sm:$0xff]
        %v583 = vld [vmem:[%s6] sm:$0x1]
        %v585 = vlaneseq
        %v586 = vshrl.u32 %v585, 7
        %v587 = vsub.s32 0, %v586
        %v588 = vrot.slane %v583, %v587
        %590 = vmatprep.subr.mxu0 0.0
        %591 = vmatpush1.msra.mxu0 %v582
        %592 = vmatprep.subr.mxu0 0.0
        %593 = vmatpush1.msra.mxu0 %v581
        %594 = vmatprep.subr.mxu0 0.0
        %595 = vmatpush1.msra.mxu0 %v580
        %596 = vmatprep.subr.mxu0 0.0
        %597 = vmatpush1.msra.mxu0 %v579
        %598 = vmatprep.subr.mxu0 0.0
        %599 = vmatpush1.msra.mxu0 %v578
        %600 = vmatprep.subr.mxu0 0.0
        %601 = vmatpush1.msra.mxu0 %v577
        %602 = vmatprep.subr.mxu0 0.0
        %603 = vmatpush1.msra.mxu0 %v576
        %604 = vmatprep.subr.mxu0 0.0
        %605 = vmatpush1.msra.mxu0 %v575
        %606 = vmatprep.subr.mxu0 0.0
        %607 = vmatpush1.msra.mxu0 %v574
        %608 = vmatprep.subr.mxu0 0.0
        %609 = vmatpush1.msra.mxu0 %v573
        %610 = vmatprep.subr.mxu0 0.0
        %611 = vmatpush1.msra.mxu0 %v572
        %612 = vmatprep.subr.mxu0 0.0
        %613 = vmatpush1.msra.mxu0 %v571
        %614 = vmatprep.subr.mxu0 0.0
        %615 = vmatpush1.msra.mxu0 %v570
        %616 = vmatprep.subr.mxu0 0.0
        %617 = vmatpush1.msra.mxu0 %v569
        %618 = vmatprep.subr.mxu0 0.0
        %619 = vmatpush1.msra.mxu0 %v568
        %620 = vmatprep.subr.mxu0 0.0
        %621 = vmatpush1.msra.mxu0 %v567
        %622 = vmatprep.subr.mxu0 0.0
        %623 = vmatpush2.msra.mxu0 0.0
        %624 = vmatprep.subr.mxu0 0.0
        %625 = vmatpush2.msra.mxu0 0.0
        %626 = vmatprep.subr.mxu0 0.0
        %627 = vmatpush2.msra.mxu0 0.0
        %628 = vmatprep.subr.mxu0 0.0
        %629 = vmatpush2.msra.mxu0 0.0
        %630 = vmatprep.subr.mxu0 0.0
        %631 = vmatpush2.msra.mxu0 0.0
        %632 = vmatprep.subr.mxu0 0.0
        %633 = vmatpush2.msra.mxu0 0.0
        %634 = vmatprep.subr.mxu0 0.0
        %635 = vmatpush2.msra.mxu0 0.0
        %636 = vmatprep.subr.mxu0 0.0
        %637 = vmatpush2.msra.mxu0 0.0
        %638 = vmatprep.subr.mxu0 0.0
        %639 = vmatpush2.msra.mxu0 0.0
        %640 = vmatprep.subr.mxu0 0.0
        %641 = vmatpush2.msra.mxu0 0.0
        %642 = vmatprep.subr.mxu0 0.0
        %643 = vmatpush2.msra.mxu0 0.0
        %644 = vmatprep.subr.mxu0 0.0
        %645 = vmatpush2.msra.mxu0 0.0
        %646 = vmatprep.subr.mxu0 0.0
        %647 = vmatpush2.msra.mxu0 0.0
        %648 = vmatprep.subr.mxu0 0.0
        %649 = vmatpush2.msra.mxu0 0.0
        %650 = vmatprep.subr.mxu0 0.0
        %651 = vmatpush2.msra.mxu0 0.0
        %652 = vmatprep.subr.mxu0 0.0
        %653 = vmatpush2.msra.mxu0 0.0
        %654 = vmatprep.mubr.f32.mxu0 0.0
        %655 = vmatmul.mubr.f32.gmra.mxu0 %v566
        %v656 = vpop.f32.mrf.mxu0
        %v657 = vadd.f32 %v588, %v656
        %v658 = vpop.f32.mrf.mxu0
        %659 = vdwg.mxu0
        %v660 = vld [vmem:[#allocation10] sm:$0xff]
        %v661 = vld [vmem:[#allocation10 + $0x8] sm:$0xff]
        %v662 = vld [vmem:[#allocation10 + $0x10] sm:$0xff]
        %v663 = vld [vmem:[#allocation10 + $0x18] sm:$0xff]
        %v664 = vld [vmem:[#allocation10 + $0x20] sm:$0xff]
        %v665 = vld [vmem:[#allocation10 + $0x28] sm:$0xff]
        %v666 = vld [vmem:[#allocation10 + $0x30] sm:$0xff]
        %v667 = vld [vmem:[#allocation10 + $0x38] sm:$0xff]
        %v668 = vld [vmem:[#allocation10 + $0x40] sm:$0xff]
        %v669 = vld [vmem:[#allocation10 + $0x48] sm:$0xff]
        %v670 = vld [vmem:[#allocation10 + $0x50] sm:$0xff]
        %v671 = vld [vmem:[#allocation10 + $0x58] sm:$0xff]
        %v672 = vld [vmem:[#allocation10 + $0x60] sm:$0xff]
        %v673 = vld [vmem:[#allocation10 + $0x68] sm:$0xff]
        %v674 = vld [vmem:[#allocation10 + $0x70] sm:$0xff]
        %v675 = vld [vmem:[#allocation10 + $0x78] sm:$0xff]
        %v676 = vld [vmem:[#allocation10 + $0x80] sm:$0xff]
        %v677 = vld [vmem:[#allocation10 + $0x88] sm:$0xff]
        %v678 = vld [vmem:[#allocation10 + $0x90] sm:$0xff]
        %v679 = vld [vmem:[#allocation10 + $0x98] sm:$0xff]
        %v680 = vld [vmem:[#allocation10 + $0xa0] sm:$0xff]
        %v681 = vld [vmem:[#allocation10 + $0xa8] sm:$0xff]
        %v682 = vld [vmem:[#allocation10 + $0xb0] sm:$0xff]
        %v683 = vld [vmem:[#allocation10 + $0xb8] sm:$0xff]
        %v684 = vld [vmem:[#allocation10 + $0xc0] sm:$0xff]
        %v685 = vld [vmem:[#allocation10 + $0xc8] sm:$0xff]
        %v686 = vld [vmem:[#allocation10 + $0xd0] sm:$0xff]
        %v687 = vld [vmem:[#allocation10 + $0xd8] sm:$0xff]
        %v688 = vld [vmem:[#allocation10 + $0xe0] sm:$0xff]
        %v689 = vld [vmem:[#allocation10 + $0xe8] sm:$0xff]
        %v690 = vld [vmem:[#allocation10 + $0xf0] sm:$0xff]
        %v691 = vld [vmem:[#allocation10 + $0xf8] sm:$0xff]
        %v692 = vld [vmem:[#allocation10 + $0x100] sm:$0xff]
        %v693 = vld [vmem:[#allocation10 + $0x108] sm:$0xff]
        %v694 = vld [vmem:[#allocation10 + $0x110] sm:$0xff]
        %v695 = vld [vmem:[#allocation10 + $0x118] sm:$0xff]
        %v696 = vld [vmem:[#allocation10 + $0x120] sm:$0xff]
        %v697 = vld [vmem:[#allocation10 + $0x128] sm:$0xff]
        %v698 = vld [vmem:[#allocation10 + $0x130] sm:$0xff]
        %v699 = vld [vmem:[#allocation10 + $0x138] sm:$0xff]
        %v700 = vld [vmem:[#allocation10 + $0x140] sm:$0xff]
        %v701 = vld [vmem:[#allocation10 + $0x148] sm:$0xff]
        %v702 = vld [vmem:[#allocation10 + $0x150] sm:$0xff]
        %v703 = vld [vmem:[#allocation10 + $0x158] sm:$0xff]
        %v704 = vld [vmem:[#allocation10 + $0x160] sm:$0xff]
        %v705 = vld [vmem:[#allocation10 + $0x168] sm:$0xff]
        %v706 = vld [vmem:[#allocation10 + $0x170] sm:$0xff]
        %v707 = vld [vmem:[#allocation10 + $0x178] sm:$0xff]
        %708 = vmatprep.subr.mxu0 %v706
        %709 = vmatpush1.msra.mxu0 %v705
        %710 = vmatprep.subr.mxu0 %v703
        %711 = vmatpush1.msra.mxu0 %v702
        %712 = vmatprep.subr.mxu0 %v700
        %713 = vmatpush1.msra.mxu0 %v699
        %714 = vmatprep.subr.mxu0 %v697
        %715 = vmatpush1.msra.mxu0 %v696
        %716 = vmatprep.subr.mxu0 %v694
        %717 = vmatpush1.msra.mxu0 %v693
        %718 = vmatprep.subr.mxu0 %v691
        %719 = vmatpush1.msra.mxu0 %v690
        %720 = vmatprep.subr.mxu0 %v688
        %721 = vmatpush1.msra.mxu0 %v687
        %722 = vmatprep.subr.mxu0 %v685
        %723 = vmatpush1.msra.mxu0 %v684
        %724 = vmatprep.subr.mxu0 %v682
        %725 = vmatpush1.msra.mxu0 %v681
        %726 = vmatprep.subr.mxu0 %v679
        %727 = vmatpush1.msra.mxu0 %v678
        %728 = vmatprep.subr.mxu0 %v676
        %729 = vmatpush1.msra.mxu0 %v675
        %730 = vmatprep.subr.mxu0 %v673
        %731 = vmatpush1.msra.mxu0 %v672
        %732 = vmatprep.subr.mxu0 %v670
        %733 = vmatpush1.msra.mxu0 %v669
        %734 = vmatprep.subr.mxu0 %v667
        %735 = vmatpush1.msra.mxu0 %v666
        %736 = vmatprep.subr.mxu0 %v664
        %737 = vmatpush1.msra.mxu0 %v663
        %738 = vmatprep.subr.mxu0 %v661
        %739 = vmatpush1.msra.mxu0 %v660
        %740 = vmatprep.subr.mxu0 0.0
        %741 = vmatpush2.msra.mxu0 0.0
        %742 = vmatprep.subr.mxu0 0.0
        %743 = vmatpush2.msra.mxu0 0.0
        %744 = vmatprep.subr.mxu0 0.0
        %745 = vmatpush2.msra.mxu0 0.0
        %746 = vmatprep.subr.mxu0 0.0
        %747 = vmatpush2.msra.mxu0 0.0
        %748 = vmatprep.subr.mxu0 0.0
        %749 = vmatpush2.msra.mxu0 0.0
        %750 = vmatprep.subr.mxu0 0.0
        %751 = vmatpush2.msra.mxu0 0.0
        %752 = vmatprep.subr.mxu0 0.0
        %753 = vmatpush2.msra.mxu0 0.0
        %754 = vmatprep.subr.mxu0 0.0
        %755 = vmatpush2.msra.mxu0 0.0
        %756 = vmatprep.subr.mxu0 0.0
        %757 = vmatpush2.msra.mxu0 0.0
        %758 = vmatprep.subr.mxu0 0.0
        %759 = vmatpush2.msra.mxu0 0.0
        %760 = vmatprep.subr.mxu0 0.0
        %761 = vmatpush2.msra.mxu0 0.0
        %762 = vmatprep.subr.mxu0 0.0
        %763 = vmatpush2.msra.mxu0 0.0
        %764 = vmatprep.subr.mxu0 0.0
        %765 = vmatpush2.msra.mxu0 0.0
        %766 = vmatprep.subr.mxu0 0.0
        %767 = vmatpush2.msra.mxu0 0.0
        %768 = vmatprep.subr.mxu0 0.0
        %769 = vmatpush2.msra.mxu0 0.0
        %770 = vmatprep.subr.mxu0 0.0
        %771 = vmatpush2.msra.mxu0 0.0
        %772 = vmatprep.mubr.f32.mxu0 0.0
        %773 = vmatmul.mubr.f32.gmra.mxu0 %v657
        %v774 = vpop.f32.mrf.mxu0
        %v775 = vadd.f32 0.0, %v774
        %v776 = vpop.f32.mrf.mxu0
        %v777 = vadd.f32 0.0, %v776
        %778 = vdwg.mxu0
        %779 = vmatprep.subr.mxu0 0.0
        %780 = vmatpush1.msra.mxu0 %v707
        %781 = vmatprep.subr.mxu0 0.0
        %782 = vmatpush1.msra.mxu0 %v704
        %783 = vmatprep.subr.mxu0 0.0
        %784 = vmatpush1.msra.mxu0 %v701
        %785 = vmatprep.subr.mxu0 0.0
        %786 = vmatpush1.msra.mxu0 %v698
        %787 = vmatprep.subr.mxu0 0.0
        %788 = vmatpush1.msra.mxu0 %v695
        %789 = vmatprep.subr.mxu0 0.0
        %790 = vmatpush1.msra.mxu0 %v692
        %791 = vmatprep.subr.mxu0 0.0
        %792 = vmatpush1.msra.mxu0 %v689
        %793 = vmatprep.subr.mxu0 0.0
        %794 = vmatpush1.msra.mxu0 %v686
        %795 = vmatprep.subr.mxu0 0.0
        %796 = vmatpush1.msra.mxu0 %v683
        %797 = vmatprep.subr.mxu0 0.0
        %798 = vmatpush1.msra.mxu0 %v680
        %799 = vmatprep.subr.mxu0 0.0
        %800 = vmatpush1.msra.mxu0 %v677
        %801 = vmatprep.subr.mxu0 0.0
        %802 = vmatpush1.msra.mxu0 %v674
        %803 = vmatprep.subr.mxu0 0.0
        %804 = vmatpush1.msra.mxu0 %v671
        %805 = vmatprep.subr.mxu0 0.0
        %806 = vmatpush1.msra.mxu0 %v668
        %807 = vmatprep.subr.mxu0 0.0
        %808 = vmatpush1.msra.mxu0 %v665
        %809 = vmatprep.subr.mxu0 0.0
        %810 = vmatpush1.msra.mxu0 %v662
        %811 = vmatprep.subr.mxu0 0.0
        %812 = vmatpush2.msra.mxu0 0.0
        %813 = vmatprep.subr.mxu0 0.0
        %814 = vmatpush2.msra.mxu0 0.0
        %815 = vmatprep.subr.mxu0 0.0
        %816 = vmatpush2.msra.mxu0 0.0
        %817 = vmatprep.subr.mxu0 0.0
        %818 = vmatpush2.msra.mxu0 0.0
        %819 = vmatprep.subr.mxu0 0.0
        %820 = vmatpush2.msra.mxu0 0.0
        %821 = vmatprep.subr.mxu0 0.0
        %822 = vmatpush2.msra.mxu0 0.0
        %823 = vmatprep.subr.mxu0 0.0
        %824 = vmatpush2.msra.mxu0 0.0
        %825 = vmatprep.subr.mxu0 0.0
        %826 = vmatpush2.msra.mxu0 0.0
        %827 = vmatprep.subr.mxu0 0.0
        %828 = vmatpush2.msra.mxu0 0.0
        %829 = vmatprep.subr.mxu0 0.0
        %830 = vmatpush2.msra.mxu0 0.0
        %831 = vmatprep.subr.mxu0 0.0
        %832 = vmatpush2.msra.mxu0 0.0
        %833 = vmatprep.subr.mxu0 0.0
        %834 = vmatpush2.msra.mxu0 0.0
        %835 = vmatprep.subr.mxu0 0.0
        %836 = vmatpush2.msra.mxu0 0.0
        %837 = vmatprep.subr.mxu0 0.0
        %838 = vmatpush2.msra.mxu0 0.0
        %839 = vmatprep.subr.mxu0 0.0
        %840 = vmatpush2.msra.mxu0 0.0
        %841 = vmatprep.subr.mxu0 0.0
        %842 = vmatpush2.msra.mxu0 0.0
        %843 = vmatprep.mubr.f32.mxu0 0.0
        %844 = vmatmul.mubr.f32.gmra.mxu0 %v657
        %v845 = vpop.f32.mrf.mxu0
        %v846 = vadd.f32 0.0, %v845
        %v847 = vpop.f32.mrf.mxu0
        %848 = vdwg.mxu0
        %849 = vmatprep.subr.mxu0 0.0
        %850 = vmatpush1.xpose.msra.mxu0 0.0
        %851 = vmatprep.subr.mxu0 0.0
        %852 = vmatpush1.xpose.msra.mxu0 0.0
        %853 = vmatprep.subr.mxu0 0.0
        %854 = vmatpush1.xpose.msra.mxu0 0.0
        %855 = vmatprep.subr.mxu0 0.0
        %856 = vmatpush1.xpose.msra.mxu0 0.0
        %857 = vmatprep.subr.mxu0 0.0
        %858 = vmatpush1.xpose.msra.mxu0 0.0
        %859 = vmatprep.subr.mxu0 0.0
        %860 = vmatpush1.xpose.msra.mxu0 0.0
        %861 = vmatprep.subr.mxu0 0.0
        %862 = vmatpush1.xpose.msra.mxu0 0.0
        %863 = vmatprep.subr.mxu0 0.0
        %864 = vmatpush1.xpose.msra.mxu0 0.0
        %865 = vmatprep.subr.mxu0 0.0
        %866 = vmatpush1.xpose.msra.mxu0 0.0
        %867 = vmatprep.subr.mxu0 0.0
        %868 = vmatpush1.xpose.msra.mxu0 0.0
        %869 = vmatprep.subr.mxu0 0.0
        %870 = vmatpush1.xpose.msra.mxu0 0.0
        %871 = vmatprep.subr.mxu0 0.0
        %872 = vmatpush1.xpose.msra.mxu0 0.0
        %873 = vmatprep.subr.mxu0 0.0
        %874 = vmatpush1.xpose.msra.mxu0 0.0
        %875 = vmatprep.subr.mxu0 0.0
        %876 = vmatpush1.xpose.msra.mxu0 0.0
        %877 = vmatprep.subr.mxu0 0.0
        %878 = vmatpush1.xpose.msra.mxu0 0.0
        %879 = vmatprep.subr.mxu0 0.0
        %880 = vmatpush1.xpose.msra.mxu0 %v777
        %881 = vmatprep.subr.mxu0 0.0
        %882 = vmatpush2.xpose.msra.mxu0 0.0
        %883 = vmatprep.subr.mxu0 0.0
        %884 = vmatpush2.xpose.msra.mxu0 0.0
        %885 = vmatprep.subr.mxu0 0.0
        %886 = vmatpush2.xpose.msra.mxu0 0.0
        %887 = vmatprep.subr.mxu0 0.0
        %888 = vmatpush2.xpose.msra.mxu0 0.0
        %889 = vmatprep.subr.mxu0 0.0
        %890 = vmatpush2.xpose.msra.mxu0 0.0
        %891 = vmatprep.subr.mxu0 0.0
        %892 = vmatpush2.xpose.msra.mxu0 0.0
        %893 = vmatprep.subr.mxu0 0.0
        %894 = vmatpush2.xpose.msra.mxu0 0.0
        %895 = vmatprep.subr.mxu0 0.0
        %896 = vmatpush2.xpose.msra.mxu0 0.0
        %897 = vmatprep.subr.mxu0 0.0
        %898 = vmatpush2.xpose.msra.mxu0 0.0
        %899 = vmatprep.subr.mxu0 0.0
        %900 = vmatpush2.xpose.msra.mxu0 0.0
        %901 = vmatprep.subr.mxu0 0.0
        %902 = vmatpush2.xpose.msra.mxu0 0.0
        %903 = vmatprep.subr.mxu0 0.0
        %904 = vmatpush2.xpose.msra.mxu0 0.0
        %905 = vmatprep.subr.mxu0 0.0
        %906 = vmatpush2.xpose.msra.mxu0 0.0
        %907 = vmatprep.subr.mxu0 0.0
        %908 = vmatpush2.xpose.msra.mxu0 0.0
        %909 = vmatprep.subr.mxu0 0.0
        %910 = vmatpush2.xpose.msra.mxu0 0.0
        %911 = vmatprep.subr.mxu0 0.0
        %912 = vmatpush2.xpose.msra.mxu0 0.0
        %913 = vmatprep.mubr.f32.mxu0 0.0
        %914 = vmatmul.mubr.f32.gmra.mxu0 %v775
        %v915 = vpop.f32.mrf.mxu0
        %v916 = vadd.f32 0.0, %v915
        %v917 = vpop.f32.mrf.mxu0
        %918 = vdwg.mxu0
        %v919 = vmul.f32 %v916, 0.17677669
        %vm920 = vcmask 64512
        %v921 = vsel %vm920, %v919, -inf
        %922 = vmax.xlane.f32.xlu0 %v921
        %v923 = vpop.xlane.xlu0 %922
        %v924 = vsub.f32 %v919, %v923
        %v925 = vmul.f32 %v924, 1.442695
        %v926 = vpow.pop %v925
        %v927 = vsel %vm920, %v926, 0.0
        %928 = vadd.xlane.f32.xlu0 %v927
        %v929 = vpop.xlane.xlu0 %928
        %v930 = vrcp.pop %v929
        %v931 = vmul.f32 %v926, %v930
        %v933 = vsel %vm920, %v931, 0
        %935 = vmatprep.subr.mxu0 0.0
        %936 = vmatpush1.msra.mxu0 0.0
        %937 = vmatprep.subr.mxu0 0.0
        %938 = vmatpush1.msra.mxu0 0.0
        %939 = vmatprep.subr.mxu0 0.0
        %940 = vmatpush1.msra.mxu0 0.0
        %941 = vmatprep.subr.mxu0 0.0
        %942 = vmatpush1.msra.mxu0 0.0
        %943 = vmatprep.subr.mxu0 0.0
        %944 = vmatpush1.msra.mxu0 0.0
        %945 = vmatprep.subr.mxu0 0.0
        %946 = vmatpush1.msra.mxu0 0.0
        %947 = vmatprep.subr.mxu0 0.0
        %948 = vmatpush1.msra.mxu0 0.0
        %949 = vmatprep.subr.mxu0 0.0
        %950 = vmatpush1.msra.mxu0 0.0
        %951 = vmatprep.subr.mxu0 0.0
        %952 = vmatpush1.msra.mxu0 0.0
        %953 = vmatprep.subr.mxu0 0.0
        %954 = vmatpush1.msra.mxu0 0.0
        %955 = vmatprep.subr.mxu0 0.0
        %956 = vmatpush1.msra.mxu0 0.0
        %957 = vmatprep.subr.mxu0 0.0
        %958 = vmatpush1.msra.mxu0 0.0
        %959 = vmatprep.subr.mxu0 0.0
        %960 = vmatpush1.msra.mxu0 0.0
        %961 = vmatprep.subr.mxu0 0.0
        %962 = vmatpush1.msra.mxu0 0.0
        %963 = vmatprep.subr.mxu0 0.0
        %964 = vmatpush1.msra.mxu0 0.0
        %965 = vmatprep.subr.mxu0 0.0
        %966 = vmatpush1.msra.mxu0 %v846
        %967 = vmatprep.subr.mxu0 0.0
        %968 = vmatpush2.msra.mxu0 0.0
        %969 = vmatprep.subr.mxu0 0.0
        %970 = vmatpush2.msra.mxu0 0.0
        %971 = vmatprep.subr.mxu0 0.0
        %972 = vmatpush2.msra.mxu0 0.0
        %973 = vmatprep.subr.mxu0 0.0
        %974 = vmatpush2.msra.mxu0 0.0
        %975 = vmatprep.subr.mxu0 0.0
        %976 = vmatpush2.msra.mxu0 0.0
        %977 = vmatprep.subr.mxu0 0.0
        %978 = vmatpush2.msra.mxu0 0.0
        %979 = vmatprep.subr.mxu0 0.0
        %980 = vmatpush2.msra.mxu0 0.0
        %981 = vmatprep.subr.mxu0 0.0
        %982 = vmatpush2.msra.mxu0 0.0
        %983 = vmatprep.subr.mxu0 0.0
        %984 = vmatpush2.msra.mxu0 0.0
        %985 = vmatprep.subr.mxu0 0.0
        %986 = vmatpush2.msra.mxu0 0.0
        %987 = vmatprep.subr.mxu0 0.0
        %988 = vmatpush2.msra.mxu0 0.0
        %989 = vmatprep.subr.mxu0 0.0
        %990 = vmatpush2.msra.mxu0 0.0
        %991 = vmatprep.subr.mxu0 0.0
        %992 = vmatpush2.msra.mxu0 0.0
        %993 = vmatprep.subr.mxu0 0.0
        %994 = vmatpush2.msra.mxu0 0.0
        %995 = vmatprep.subr.mxu0 0.0
        %996 = vmatpush2.msra.mxu0 0.0
        %997 = vmatprep.subr.mxu0 0.0
        %998 = vmatpush2.msra.mxu0 0.0
        %999 = vmatprep.mubr.f32.mxu0 0.0
        %1000 = vmatmul.mubr.f32.gmra.mxu0 %v933
        %v1001 = vpop.f32.mrf.mxu0
        %v1002 = vadd.f32 0.0, %v1001
        %v1003 = vpop.f32.mrf.mxu0
        %1004 = vdwg.mxu0
        %1005 = vst [vmem:[%s378] sm:$0xff] %v1002
        %s1006 = sand.u32 %s208, 1
        %s1007 = scalar_lea.sflag [#allocation4], %s1006
        %s1008 = sand.u32 %s208, 1
        %s1009 = smul.addr %s1008, 8
        %s1010 = scalar_lea.vmem [#allocation11], %s1009
        // Predicated region
        $region73: #{tpu_custom_call.1} parent=51 // pred_check
          %p1011 = pneg %p218
        $region74: #{tpu_custom_call.1} parent=51 // pred_check_branch
          %1013 = sbr.rel (%p1011) target = $region76
        $region75: #{tpu_custom_call.1} parent=51 // pred_region
          %s1015 = ssub.s32 128, 128
          %1016 = vsyncadd %s1007, %s1015
          %s1017 = smul.addr %s27, 128
          %s1018 = scalar_lea.hbm %s8, %s1017
          %s1020 = sshll.u32 %s1010, 4
          %s1021 = int_to_ptr.vmem [resolvable:$true] %s1020
          %1023 = dma.vmem_to_hbm [thread:$0]  %s1021, 128, %s1018, %s1007
        $region76: #{tpu_custom_call.1} parent=51 // pred_fallthru
          _
      $region52: #{tpu_custom_call.1} parent=5 // pred_fallthru
        _
      %p1024 = scmp.le.s32.totalorder 2, %s22
      // Predicated region
      $region77: #{tpu_custom_call.1} parent=5 // pred_check
        %p1025 = pneg %p1024
      $region78: #{tpu_custom_call.1} parent=5 // pred_check_branch
        %1027 = sbr.rel (%p1025) target = $region80
      $region79: #{tpu_custom_call.1} parent=5 // pred_region
        %s1028 = ssub.s32 %s22, 2
        // Predicated region
        $region81: #{tpu_custom_call.1} parent=79 // pred_check
          %p1029 = pneg %p224
        $region82: #{tpu_custom_call.1} parent=79 // pred_check_branch
          %1031 = sbr.rel (%p1029) target = $region84
        $region83: #{tpu_custom_call.1} parent=79 // pred_region
          %s1032 = sand.u32 %s209, 1
          %s1033 = scalar_lea.sflag [#allocation4], %s1032
          %s1034 = sand.u32 %s209, 1
          %s1035 = smul.addr %s1034, 8
          %s1036 = scalar_lea.vmem [#allocation11], %s1035
          %1037 = dma.done %s1033, 128
        $region84: #{tpu_custom_call.1} parent=79 // pred_fallthru
          _
      $region80: #{tpu_custom_call.1} parent=5 // pred_fallthru
        _
    $region6: #{tpu_custom_call.1} parent=1 // loop_footer
      %s26 = sadd.s32 1, %s22
    $region7: #{tpu_custom_call.1} parent=1 // loop_footer_branch
      %21 = sbr.rel target = $region3
    $region8: #{tpu_custom_call.1} parent=1 // loop_exit
      _
    %1038 = vsyncpa [#allocation3], 1
    %s1039 = scalar_lea.sflag [#allocation3], 1
    %1040 = vsyncpa %s1039, 1
    %1041 = vsyncpa [#allocation6], 1
    %1042 = vsyncpa [#allocation9], 1
    %1043 = vsyncpa [#allocation4], 1
    %s1044 = scalar_lea.sflag [#allocation4], 1
    %1045 = vsyncpa %s1044, 1

</llo_original>
